<compile_context>
chip_gen: v7x
topology: tpu7x:2x2x1
jax: 0.10.0
libtpu: 0.0.40
codegen_flags: <defaults>
</compile_context>

<pallas_src>
import jax
import jax.numpy as jnp
from jax.experimental import pallas as pl
from jax.experimental.pallas import tpu as pltpu


def _copy_kernel(x_ref, o_ref):
    # Straight VMEM load -> store of the current (lane-dense) block.
    o_ref[...] = x_ref[...]


def _lane_dense_2d(x: jax.Array):
    """Return a lane-dense 2D view of x, or None if one can't be formed."""
    last = x.shape[-1]
    if last % 128 == 0:
        return x.reshape(-1, last)          # keep feature dim whole on the lane axis
    if x.size % 128 == 0:
        return x.reshape(-1, 128)           # generic lane-dense flatten
    return None


def _single_block_copy(x2d: jax.Array, cost: pl.CostEstimate) -> jax.Array:
    # Whole array as one VMEM block: no grid, no per-step overhead.
    return pl.pallas_call(
        _copy_kernel,
        out_shape=jax.ShapeDtypeStruct(x2d.shape, x2d.dtype),
        in_specs=[pl.BlockSpec(memory_space=pltpu.MemorySpace.VMEM)],
        out_specs=pl.BlockSpec(memory_space=pltpu.MemorySpace.VMEM),
        cost_estimate=cost,
    )(x2d)


def dummy_transformer_block(x: jax.Array, *, keep_op_boundary: bool = True) -> jax.Array:
    """Identity forward of DummyTransformerBlock.

    keep_op_boundary=False is the production fast path (`return x`, zero cost).
    With keep_op_boundary=True an explicit Pallas copy is emitted at minimal cost.
    """
    if not keep_op_boundary:
        return x

    itemsize = jnp.dtype(x.dtype).itemsize
    cost = pl.CostEstimate(
        flops=0, transcendentals=0, bytes_accessed=2 * x.size * itemsize
    )

    x2d = _lane_dense_2d(x)
    if x2d is None:
        # Full-array block in original shape: full-extent dims are exempt from
        # the (8, 128) divisibility rule, so this is always legal (just not
        # guaranteed lane-dense).
        y = pl.pallas_call(
            _copy_kernel,
            out_shape=jax.ShapeDtypeStruct(x.shape, x.dtype),
            in_specs=[pl.BlockSpec(memory_space=pltpu.MemorySpace.VMEM)],
            out_specs=pl.BlockSpec(memory_space=pltpu.MemorySpace.VMEM),
            cost_estimate=cost,
        )(x)
        return y

    rows, lanes = x2d.shape
    row_bytes = lanes * itemsize
    total_bytes = rows * row_bytes
    # Sublane packing factor: f32 -> 8 rows/vreg, bf16 -> 16, int8/fp8 -> 32.
    pack = 8 * max(1, 4 // itemsize)

    # Small tensors (the (2, 4, 768) case is 24 KiB): single ungridded block.
    if total_bytes <= (2 << 20) or rows % pack != 0:
        y2d = _single_block_copy(x2d, cost)
        return y2d.reshape(x.shape)

    # Large-tensor path: grid over rows.  Block bytes capped at 2 MiB so the
    # double-buffered in+out footprint (4x) fits every generation's scoped
    # VMEM default (v5e 16 MiB) without touching vmem_limit_bytes.
    max_block_bytes = 2 << 20
    cap = min(1024, rows, max(pack, max_block_bytes // row_bytes))
    block_rows = pack
    for cand in range(pack, cap + 1, pack):
        if rows % cand == 0:
            block_rows = cand

    y2d = pl.pallas_call(
        _copy_kernel,
        out_shape=jax.ShapeDtypeStruct((rows, lanes), x.dtype),
        grid=(rows // block_rows,),
        in_specs=[pl.BlockSpec((block_rows, lanes), lambda i: (i, 0))],
        out_specs=pl.BlockSpec((block_rows, lanes), lambda i: (i, 0)),
        cost_estimate=cost,
        compiler_params=pltpu.CompilerParams(
            dimension_semantics=("parallel",)
        ),
    )(x2d)
    return y2d.reshape(x.shape)


if __name__ == "__main__":
    key = jax.random.PRNGKey(0)
    # Shape consistent with the module's example input torch.rand(2, 4, 768).
    x = jax.random.uniform(key, (2, 4, 768), dtype=jnp.float32)

    y = dummy_transformer_block(x)
    y = jax.block_until_ready(y)

    assert y.shape == x.shape and y.dtype == x.dtype
    assert bool(jnp.all(y == x))

    # Also exercise the zero-cost fast path.
    y_fast = jax.block_until_ready(dummy_transformer_block(x, keep_op_boundary=False))
    assert bool(jnp.all(y_fast == x))

    print("KERNEL_OK")
</pallas_src>

<mosaic_0001>
module attributes {stable_mosaic.version = 11 : i64} {
  func.func @_copy_kernel(%arg0: memref<8x768xf32, #tpu.memory_space<vmem>>, %arg1: memref<8x768xf32, #tpu.memory_space<vmem>>) attributes {dimension_semantics = [], scalar_prefetch = 0 : i64, scratch_operands = 0 : i64, tpu.core_type = #tpu.core_type<tc>} {
    %c0 = arith.constant 0 : index
    %c0_0 = arith.constant 0 : index
    %0 = vector.load %arg0[%c0, %c0_0] : memref<8x768xf32, #tpu.memory_space<vmem>>, vector<8x768xf32>
    %c0_1 = arith.constant 0 : index
    %c0_2 = arith.constant 0 : index
    %1 = vector.load %arg1[%c0_1, %c0_2] : memref<8x768xf32, #tpu.memory_space<vmem>>, vector<8x768xf32>
    tpu.vector_store %arg1[%c0_1, %c0_2], %0 {strides = array<i32>} : memref<8x768xf32, #tpu.memory_space<vmem>>, vector<8x768xf32>,
    return
  }
}

</mosaic_0001>

<llo_original>
// kernel: tpu_custom_call.1
$region0: #{tpu_custom_call.1}
  #allocation0 [shape = 'u32[]', space=smem, size = 0x4, offset = 0x4, fixed_abs, tag = 'smem constant byte address 0x4 - core index']
  #allocation1 [shape = 'u32[144,128]{1,0:T(1,128)}', space=vmem, size = 0x12000, scoped, tag = 'internal scratch']
  %s0 = inlined_call_operand.hbm [shape: f32[8,768], index: 0, kind: input, shape index: {}]
  %s1 = inlined_call_operand.hbm [shape: f32[8,768], index: 1, kind: output, shape index: {}]
  %s2 = sld [smem:[#allocation0]]
  $region18: #{tpu_custom_call.1} parent=0
    _
  %s4 = ssub.s32 1, %s2
  %s5 = scalar_select 0, %s4, %s2
  $region1: #{tpu_custom_call.1} parent=0
    #allocation2 [shape = 'u8[24576]{0}', space=vmem, size = 0x6000, scoped, tag = 'input window, operand 0, single buffered']
    #allocation3 [shape = 's32[1]{0}', space=sflag, size = 0x4, scoped, tag = 'scoped memory for tpu_custom_call.1']
    #allocation4 [shape = 's32[1]{0}', space=sflag, size = 0x4, scoped, tag = 'scoped memory for tpu_custom_call.1']
    #allocation5 [shape = 'u8[24576]{0}', space=vmem, size = 0x6000, scoped, tag = 'output window, operand 0, single buffered']
    %6 = vsyncpa [#allocation3], 0
    %7 = vsyncpa [#allocation4], 0
    // Predicated region
    $region2: #{tpu_custom_call.1} parent=1 // pred_check
      _
    $region3: #{tpu_custom_call.1} parent=1 // pred_check_branch
      %9 = sbr.rel (0) target = $region5
    $region4: #{tpu_custom_call.1} parent=1 // pred_region
      %s11 = ssub.s32 768, 768
      %12 = vsyncadd [#allocation3], %s11
      %s14 = sshll.u32 [#allocation2], 4
      %s15 = int_to_ptr.vmem [resolvable:$true] %s14
      %17 = dma.hbm_to_vmem [thread:$0]  %s0, 768, %s15, [#allocation3]
    $region5: #{tpu_custom_call.1} parent=1 // pred_fallthru
      _
    // Predicated region
    $region6: #{tpu_custom_call.1} parent=1 // pred_check
      _
    $region7: #{tpu_custom_call.1} parent=1 // pred_check_branch
      %19 = sbr.rel (0) target = $region9
    $region8: #{tpu_custom_call.1} parent=1 // pred_region
      %20 = dma.done [#allocation3], 768
    $region9: #{tpu_custom_call.1} parent=1 // pred_fallthru
      _
    %v21 = vld [vmem:[#allocation2] sm:$0xff]
    %v22 = vld [vmem:[#allocation2 + $0x8] sm:$0xff]
    %v23 = vld [vmem:[#allocation2 + $0x10] sm:$0xff]
    %v24 = vld [vmem:[#allocation2 + $0x18] sm:$0xff]
    %v25 = vld [vmem:[#allocation2 + $0x20] sm:$0xff]
    %v26 = vld [vmem:[#allocation2 + $0x28] sm:$0xff]
    %27 = vst [vmem:[#allocation5] sm:$0xff] %v21
    %28 = vst [vmem:[#allocation5 + $0x8] sm:$0xff] %v22
    %29 = vst [vmem:[#allocation5 + $0x10] sm:$0xff] %v23
    %30 = vst [vmem:[#allocation5 + $0x18] sm:$0xff] %v24
    %31 = vst [vmem:[#allocation5 + $0x20] sm:$0xff] %v25
    %32 = vst [vmem:[#allocation5 + $0x28] sm:$0xff] %v26
    // Predicated region
    $region10: #{tpu_custom_call.1} parent=1 // pred_check
      _
    $region11: #{tpu_custom_call.1} parent=1 // pred_check_branch
      %34 = sbr.rel (0) target = $region13
    $region12: #{tpu_custom_call.1} parent=1 // pred_region
      %s36 = ssub.s32 768, 768
      %37 = vsyncadd [#allocation4], %s36
      %s39 = sshll.u32 [#allocation5], 4
      %s40 = int_to_ptr.vmem [resolvable:$true] %s39
      %42 = dma.vmem_to_hbm [thread:$0]  %s40, 768, %s1, [#allocation4]
    $region13: #{tpu_custom_call.1} parent=1 // pred_fallthru
      _
    // Predicated region
    $region14: #{tpu_custom_call.1} parent=1 // pred_check
      _
    $region15: #{tpu_custom_call.1} parent=1 // pred_check_branch
      %44 = sbr.rel (0) target = $region17
    $region16: #{tpu_custom_call.1} parent=1 // pred_region
      %45 = dma.done [#allocation4], 768
    $region17: #{tpu_custom_call.1} parent=1 // pred_fallthru
      _
    %46 = vsyncpa [#allocation3], 1
    %47 = vsyncpa [#allocation4], 1

</llo_original>
